<compile_context>
chip_gen: v5e
topology: v5e:2x2
jax: 0.10.0
libtpu: 0.0.40
codegen_flags: <defaults>
</compile_context>

<pallas_src>
import jax
import jax.numpy as jnp
from jax.experimental import pallas as pl
from jax.experimental.pallas import tpu as pltpu


def _round_up(x, m):
    return (x + m - 1) // m * m


def _cdiv(a, b):
    return (a + b - 1) // b


def _critic_kernel(x_ref, w1_ref, b1_ref, w2_ref, b2_ref, w3_ref, b3_ref, o_ref):
    """Transposed dataflow: batch on the lane axis.

    x_ref : (f_in, tb)  [state; action]^T activation tile (f32 stream)
    w*    : PyTorch-native (out, in) layout, resident in VMEM
    b*    : (out, 1) f32, lane-broadcast
    o_ref : (1, tb)     lane-dense Q writeback
    """
    wdt = w1_ref.dtype
    # In-kernel cast of the streamed tile (no wrapper convert pass); no-op for f32.
    x = x_ref[...].astype(wdt)
    # fc1 (single merged matmul) + ReLU; accumulate in f32.
    h1 = jnp.dot(w1_ref[...], x, preferred_element_type=jnp.float32)
    h1 = jnp.maximum(h1 + b1_ref[...], 0.0).astype(wdt)
    # fc2 + ReLU
    h2 = jnp.dot(w2_ref[...], h1, preferred_element_type=jnp.float32)
    h2 = jnp.maximum(h2 + b2_ref[...], 0.0).astype(wdt)
    # fc3
    q = jnp.dot(w3_ref[...], h2, preferred_element_type=jnp.float32) + b3_ref[...]
    o_ref[...] = q.astype(o_ref.dtype)


def ddpg_critic_forward(state, action, params, *, block_b=2048, compute_dtype=None):
    """state: (B, state_dim) f32, action: (B, action_dim) f32 -> (B, 1) f32.

    params = (w1, b1, w2, b2, w3, b3) in PyTorch layout: w (out, in), b (out, 1).
    compute_dtype=jnp.bfloat16 streams f32 but runs the MXU in bf16 (f32 accum).
    """
    w1, b1, w2, b2, w3, b3 = params
    B, state_dim = state.shape
    action_dim = action.shape[1]
    f_in = state_dim + action_dim
    assert w1.shape == (16, f_in)

    if compute_dtype is not None:
        # Only the tiny resident weights are pre-cast; streamed activations are
        # cast inside the kernel. Biases stay f32.
        w1, w2, w3 = (w.astype(compute_dtype) for w in (w1, w2, w3))

    # Batch tile along the lane axis: multiple of 128; aim for >=2 grid steps
    # (so v7x's two TensorCores both get work), capped by block_b.
    lane = 128
    n_blocks = max(1, _cdiv(B, lane))
    max_tile_blocks = max(1, _round_up(block_b, lane) // lane)
    tile_blocks = 1 if n_blocks < 2 else min(max_tile_blocks, _cdiv(n_blocks, 2))
    tb = tile_blocks * lane
    b_pad = _round_up(B, tb)
    grid = (b_pad // tb,)

    # Single wrapper pass: concat + pad + transpose -> (f_in, b_pad) slab with
    # batch on the lane axis (merges fc1's two matmuls; dense (8,128)-aligned tiles).
    x = jnp.concatenate([state, action], axis=1)          # (B, f_in)
    if b_pad != B:
        x = jnp.pad(x, ((0, b_pad - B), (0, 0)))
    x_t = x.T                                              # (f_in, b_pad), f32

    wt_bytes = jnp.dtype(w1.dtype).itemsize
    cost = pl.CostEstimate(
        flops=2 * B * (f_in * 16 + 16 * 16 + 16 * 1),
        transcendentals=0,
        bytes_accessed=(B * f_in * 4 + B * 4
                        + (f_in * 16 + 16 * 16 + 16) * wt_bytes
                        + (16 + 16 + 1) * 4),
    )

    resident = lambda i: (0, 0)   # weights/biases: same block every step -> VMEM-resident
    tiled = lambda i: (0, i)      # activation / output tiles march along the lane axis

    out = pl.pallas_call(
        _critic_kernel,
        out_shape=jax.ShapeDtypeStruct((1, b_pad), jnp.float32),
        grid=grid,
        in_specs=[
            pl.BlockSpec((f_in, tb), tiled),     # [state|action]^T tile (double-buffered)
            pl.BlockSpec((16, f_in), resident),  # w1
            pl.BlockSpec((16, 1), resident),     # b1
            pl.BlockSpec((16, 16), resident),    # w2
            pl.BlockSpec((16, 1), resident),     # b2
            pl.BlockSpec((1, 16), resident),     # w3
            pl.BlockSpec((1, 1), resident),      # b3
        ],
        out_specs=pl.BlockSpec((1, tb), tiled),  # lane-dense Q slab
        compiler_params=pltpu.CompilerParams(
            dimension_semantics=("parallel",),   # shard batch tiles across v7x's 2 TCs
        ),
        cost_estimate=cost,
    )(x_t, w1, b1, w2, b2, w3, b3)

    return out[0, :B][:, None]                   # back to the module's (B, 1) shape


def init_params(key, state_dim, action_dim):
    """nn.Linear-style init (uniform +/- 1/sqrt(fan_in)), PyTorch (out, in) layout."""
    def linear(k, fan_in, fan_out):
        kw, kb = jax.random.split(k)
        bound = 1.0 / (fan_in ** 0.5)
        w = jax.random.uniform(kw, (fan_out, fan_in), jnp.float32, -bound, bound)
        b = jax.random.uniform(kb, (fan_out, 1), jnp.float32, -bound, bound)
        return w, b

    k1, k2, k3 = jax.random.split(key, 3)
    w1, b1 = linear(k1, state_dim + action_dim, 16)
    w2, b2 = linear(k2, 16, 16)
    w3, b3 = linear(k3, 16, 1)
    return (w1, b1, w2, b2, w3, b3)


def reference_forward(state, action, params):
    """Pure-JAX reference mirroring the PyTorch module (explicit concat, batch-major)."""
    w1, b1, w2, b2, w3, b3 = params
    x = jnp.concatenate([state, action], axis=1)
    h1 = jnp.maximum(x @ w1.T + b1.T, 0.0)
    h2 = jnp.maximum(h1 @ w2.T + b2.T, 0.0)
    return h2 @ w3.T + b3.T


if __name__ == "__main__":
    state_dim, action_dim = 6, 2
    key = jax.random.PRNGKey(0)
    key, kp = jax.random.split(key)
    params = init_params(kp, state_dim, action_dim)

    # Small case: B=8 -> one 128-lane tile, single grid step.
    key, ks, ka = jax.random.split(key, 3)
    s_small = jax.random.normal(ks, (8, state_dim), jnp.float32)
    a_small = jax.random.normal(ka, (8, action_dim), jnp.float32)
    q_small = ddpg_critic_forward(s_small, a_small, params)
    jax.block_until_ready(q_small)
    q_small_ref = reference_forward(s_small, a_small, params)
    assert q_small.shape == (8, 1), q_small.shape
    assert jnp.allclose(q_small, q_small_ref, atol=1e-5, rtol=1e-5)

    # Multi-tile case: B not a multiple of the tile (exercises lane padding + grid).
    key, ks, ka = jax.random.split(key, 3)
    B = 300
    s_big = jax.random.normal(ks, (B, state_dim), jnp.float32)
    a_big = jax.random.normal(ka, (B, action_dim), jnp.float32)
    q_big = ddpg_critic_forward(s_big, a_big, params, block_b=128)
    jax.block_until_ready(q_big)
    q_big_ref = reference_forward(s_big, a_big, params)
    assert q_big.shape == (B, 1), q_big.shape
    assert jnp.allclose(q_big, q_big_ref, atol=1e-5, rtol=1e-5)

    # Default tile sizing (>=2 grid steps for v7x megacore) + bf16 MXU path
    # (weights pre-cast once, activations cast in-kernel, f32 accumulation).
    q_bf16 = ddpg_critic_forward(s_big, a_big, params, compute_dtype=jnp.bfloat16)
    jax.block_until_ready(q_bf16)
    assert q_bf16.shape == (B, 1), q_bf16.shape
    assert jnp.allclose(q_bf16, q_big_ref, atol=1e-1, rtol=1e-1)

    print("KERNEL_OK")
</pallas_src>

<mosaic_0001>
module attributes {stable_mosaic.version = 11 : i64} {
  func.func @_critic_kernel(%arg0: i32, %arg1: memref<8x128xf32, #tpu.memory_space<vmem>>, %arg2: memref<16x8xf32, #tpu.memory_space<vmem>>, %arg3: memref<16x1xf32, #tpu.memory_space<vmem>>, %arg4: memref<16x16xf32, #tpu.memory_space<vmem>>, %arg5: memref<16x1xf32, #tpu.memory_space<vmem>>, %arg6: memref<1x16xf32, #tpu.memory_space<vmem>>, %arg7: memref<1x1xf32, #tpu.memory_space<vmem>>, %arg8: memref<1x128xf32, #tpu.memory_space<vmem>>) attributes {dimension_semantics = [#tpu.dimension_semantics<parallel>], iteration_bounds = array<i64: 1>, scalar_prefetch = 0 : i64, scratch_operands = 0 : i64, tpu.core_type = #tpu.core_type<tc>, window_params = [{transform_indices = @transform_0, window_bounds = array<i64: 8, 128>}, {pipeline_mode = #tpu.pipeline_mode<synchronous>, transform_indices = @transform_1, window_bounds = array<i64: 16, 8>}, {pipeline_mode = #tpu.pipeline_mode<synchronous>, transform_indices = @transform_2, window_bounds = array<i64: 16, 1>}, {pipeline_mode = #tpu.pipeline_mode<synchronous>, transform_indices = @transform_3, window_bounds = array<i64: 16, 16>}, {pipeline_mode = #tpu.pipeline_mode<synchronous>, transform_indices = @transform_4, window_bounds = array<i64: 16, 1>}, {pipeline_mode = #tpu.pipeline_mode<synchronous>, transform_indices = @transform_5, window_bounds = array<i64: 1, 16>}, {pipeline_mode = #tpu.pipeline_mode<synchronous>, transform_indices = @transform_6, window_bounds = array<i64: 1, 1>}, {transform_indices = @transform_7, window_bounds = array<i64: 1, 128>}]} {
    %c0 = arith.constant 0 : index
    %c0_0 = arith.constant 0 : index
    %0 = vector.load %arg1[%c0, %c0_0] : memref<8x128xf32, #tpu.memory_space<vmem>>, vector<8x128xf32>
    %c0_1 = arith.constant 0 : index
    %c0_2 = arith.constant 0 : index
    %1 = vector.load %arg2[%c0_1, %c0_2] : memref<16x8xf32, #tpu.memory_space<vmem>>, vector<16x8xf32>
    %cst = arith.constant dense<0.000000e+00> : vector<16x128xf32>
    %2 = tpu.matmul %1, %0, %cst {dimension_numbers = #tpu.dot_dimension_numbers<[1], [0], [0], [1], [0, 0, 1, 1], [], []>} : vector<16x8xf32>, vector<8x128xf32>, vector<16x128xf32> -> vector<16x128xf32>
    %c0_3 = arith.constant 0 : index
    %c0_4 = arith.constant 0 : index
    %3 = vector.load %arg3[%c0_3, %c0_4] : memref<16x1xf32, #tpu.memory_space<vmem>>, vector<16x1xf32>
    %4 = vector.broadcast %3 : vector<16x1xf32> to vector<16x128xf32>
    %5 = arith.addf %2, %4 : vector<16x128xf32>
    %cst_5 = arith.constant 0.000000e+00 : f32
    %6 = vector.broadcast %cst_5 : f32 to vector<16x128xf32>
    %7 = arith.maximumf %5, %6 : vector<16x128xf32>
    %c0_6 = arith.constant 0 : index
    %c0_7 = arith.constant 0 : index
    %8 = vector.load %arg4[%c0_6, %c0_7] : memref<16x16xf32, #tpu.memory_space<vmem>>, vector<16x16xf32>
    %cst_8 = arith.constant dense<0.000000e+00> : vector<16x128xf32>
    %9 = tpu.matmul %8, %7, %cst_8 {dimension_numbers = #tpu.dot_dimension_numbers<[1], [0], [0], [1], [0, 0, 1, 1], [], []>} : vector<16x16xf32>, vector<16x128xf32>, vector<16x128xf32> -> vector<16x128xf32>
    %c0_9 = arith.constant 0 : index
    %c0_10 = arith.constant 0 : index
    %10 = vector.load %arg5[%c0_9, %c0_10] : memref<16x1xf32, #tpu.memory_space<vmem>>, vector<16x1xf32>
    %11 = vector.broadcast %10 : vector<16x1xf32> to vector<16x128xf32>
    %12 = arith.addf %9, %11 : vector<16x128xf32>
    %cst_11 = arith.constant 0.000000e+00 : f32
    %13 = vector.broadcast %cst_11 : f32 to vector<16x128xf32>
    %14 = arith.maximumf %12, %13 : vector<16x128xf32>
    %c0_12 = arith.constant 0 : index
    %c0_13 = arith.constant 0 : index
    %15 = vector.load %arg6[%c0_12, %c0_13] : memref<1x16xf32, #tpu.memory_space<vmem>>, vector<1x16xf32>
    %cst_14 = arith.constant dense<0.000000e+00> : vector<1x128xf32>
    %16 = tpu.matmul %15, %14, %cst_14 {dimension_numbers = #tpu.dot_dimension_numbers<[1], [0], [0], [1], [0, 0, 1, 1], [], []>} : vector<1x16xf32>, vector<16x128xf32>, vector<1x128xf32> -> vector<1x128xf32>
    %c0_15 = arith.constant 0 : index
    %c0_16 = arith.constant 0 : index
    %17 = vector.load %arg7[%c0_15, %c0_16] : memref<1x1xf32, #tpu.memory_space<vmem>>, vector<1x1xf32>
    %18 = vector.broadcast %17 : vector<1x1xf32> to vector<1x128xf32>
    %19 = arith.addf %16, %18 : vector<1x128xf32>
    %c0_17 = arith.constant 0 : index
    %c0_18 = arith.constant 0 : index
    %20 = vector.load %arg8[%c0_17, %c0_18] : memref<1x128xf32, #tpu.memory_space<vmem>>, vector<1x128xf32>
    tpu.vector_store %arg8[%c0_17, %c0_18], %19 {strides = array<i32>} : memref<1x128xf32, #tpu.memory_space<vmem>>, vector<1x128xf32>,
    return
  }
  func.func @transform_0(%arg0: i32) -> (i32, i32) {
    %c0_i32 = arith.constant 0 : i32
    %c0_i32_0 = arith.constant 0 : i32
    return %c0_i32, %arg0 : i32, i32
  }
  func.func @transform_1(%arg0: i32) -> (i32, i32) {
    %c0_i32 = arith.constant 0 : i32
    %c0_i32_0 = arith.constant 0 : i32
    %c0_i32_1 = arith.constant 0 : i32
    return %c0_i32, %c0_i32_0 : i32, i32
  }
  func.func @transform_2(%arg0: i32) -> (i32, i32) {
    %c0_i32 = arith.constant 0 : i32
    %c0_i32_0 = arith.constant 0 : i32
    %c0_i32_1 = arith.constant 0 : i32
    return %c0_i32, %c0_i32_0 : i32, i32
  }
  func.func @transform_3(%arg0: i32) -> (i32, i32) {
    %c0_i32 = arith.constant 0 : i32
    %c0_i32_0 = arith.constant 0 : i32
    %c0_i32_1 = arith.constant 0 : i32
    return %c0_i32, %c0_i32_0 : i32, i32
  }
  func.func @transform_4(%arg0: i32) -> (i32, i32) {
    %c0_i32 = arith.constant 0 : i32
    %c0_i32_0 = arith.constant 0 : i32
    %c0_i32_1 = arith.constant 0 : i32
    return %c0_i32, %c0_i32_0 : i32, i32
  }
  func.func @transform_5(%arg0: i32) -> (i32, i32) {
    %c0_i32 = arith.constant 0 : i32
    %c0_i32_0 = arith.constant 0 : i32
    %c0_i32_1 = arith.constant 0 : i32
    return %c0_i32, %c0_i32_0 : i32, i32
  }
  func.func @transform_6(%arg0: i32) -> (i32, i32) {
    %c0_i32 = arith.constant 0 : i32
    %c0_i32_0 = arith.constant 0 : i32
    %c0_i32_1 = arith.constant 0 : i32
    return %c0_i32, %c0_i32_0 : i32, i32
  }
  func.func @transform_7(%arg0: i32) -> (i32, i32) {
    %c0_i32 = arith.constant 0 : i32
    %c0_i32_0 = arith.constant 0 : i32
    return %c0_i32, %arg0 : i32, i32
  }
}

</mosaic_0001>

<llo_original>
// kernel: tpu_custom_call.1
$region0: #{tpu_custom_call.1}
  #allocation0 [shape = 'u32[]', space=smem, size = 0x4, offset = 0x4, fixed_abs, tag = 'smem constant byte address 0x4 - core index']
  #allocation1 [shape = 'u32[72,128]{1,0:T(1,128)}', space=vmem, size = 0x9000, scoped, tag = 'internal scratch']
  #allocation2 [shape = 'f32[1,1]{1,0:T(1,128)S(1)}', space=vmem, size = 0x200, scoped, tag = 'scoped memory for tpu_custom_call.1']
  %s0 = inlined_call_operand.vmem [shape: f32[8,128], index: 0, kind: input, shape index: {}]
  %s1 = inlined_call_operand.vmem [shape: f32[16,8], index: 1, kind: input, shape index: {}]
  %s2 = inlined_call_operand.vmem [shape: f32[16,1], index: 2, kind: input, shape index: {}]
  %s3 = inlined_call_operand.vmem [shape: f32[16,16], index: 3, kind: input, shape index: {}]
  %s4 = inlined_call_operand.vmem [shape: f32[16,1], index: 4, kind: input, shape index: {}]
  %s5 = inlined_call_operand.vmem [shape: f32[1,16], index: 5, kind: input, shape index: {}]
  %s6 = inlined_call_operand.<no memory space> [shape: f32[1,1], index: 6, kind: input, shape index: {}]
  %s7 = inlined_call_operand.hbm [shape: f32[1,128], index: 7, kind: output, shape index: {}]
  %s8 = sld [smem:[#allocation0]]
  $region38: #{tpu_custom_call.1} parent=0
    _
  %s10 = ssub.s32 1, %s8
  %s11 = scalar_select 0, %s10, %s8
  %v12 = vstv %s6
  %13 = vst [vmem:[#allocation2] sm:$0x1] %v12
  $region1: #{tpu_custom_call.1} parent=0
    #allocation3 [shape = 'u8[512]{0}', space=vmem, size = 0x400, scoped, tag = 'output window, operand 0, single buffered']
    #allocation4 [shape = 's32[1]{0}', space=sflag, size = 0x4, scoped, tag = 'scoped memory for tpu_custom_call.1']
    %14 = vsyncpa [#allocation4], 0
    // Predicated region
    $region2: #{tpu_custom_call.1} parent=1 // pred_check
      _
    $region3: #{tpu_custom_call.1} parent=1 // pred_check_branch
      %16 = sbr.rel (0) target = $region5
    $region4: #{tpu_custom_call.1} parent=1 // pred_region
      _
    $region5: #{tpu_custom_call.1} parent=1 // pred_fallthru
      _
    // Predicated region
    $region6: #{tpu_custom_call.1} parent=1 // pred_check
      _
    $region7: #{tpu_custom_call.1} parent=1 // pred_check_branch
      %18 = sbr.rel (0) target = $region9
    $region8: #{tpu_custom_call.1} parent=1 // pred_region
      _
    $region9: #{tpu_custom_call.1} parent=1 // pred_fallthru
      _
    // Predicated region
    $region10: #{tpu_custom_call.1} parent=1 // pred_check
      _
    $region11: #{tpu_custom_call.1} parent=1 // pred_check_branch
      %20 = sbr.rel (0) target = $region13
    $region12: #{tpu_custom_call.1} parent=1 // pred_region
      _
    $region13: #{tpu_custom_call.1} parent=1 // pred_fallthru
      _
    // Predicated region
    $region14: #{tpu_custom_call.1} parent=1 // pred_check
      _
    $region15: #{tpu_custom_call.1} parent=1 // pred_check_branch
      %22 = sbr.rel (0) target = $region17
    $region16: #{tpu_custom_call.1} parent=1 // pred_region
      _
    $region17: #{tpu_custom_call.1} parent=1 // pred_fallthru
      _
    // Predicated region
    $region18: #{tpu_custom_call.1} parent=1 // pred_check
      _
    $region19: #{tpu_custom_call.1} parent=1 // pred_check_branch
      %24 = sbr.rel (0) target = $region21
    $region20: #{tpu_custom_call.1} parent=1 // pred_region
      _
    $region21: #{tpu_custom_call.1} parent=1 // pred_fallthru
      _
    // Predicated region
    $region22: #{tpu_custom_call.1} parent=1 // pred_check
      _
    $region23: #{tpu_custom_call.1} parent=1 // pred_check_branch
      %26 = sbr.rel (0) target = $region25
    $region24: #{tpu_custom_call.1} parent=1 // pred_region
      _
    $region25: #{tpu_custom_call.1} parent=1 // pred_fallthru
      _
    // Predicated region
    $region26: #{tpu_custom_call.1} parent=1 // pred_check
      _
    $region27: #{tpu_custom_call.1} parent=1 // pred_check_branch
      %28 = sbr.rel (0) target = $region29
    $region28: #{tpu_custom_call.1} parent=1 // pred_region
      _
    $region29: #{tpu_custom_call.1} parent=1 // pred_fallthru
      _
    %v29 = vld [vmem:[%s0] sm:$0xff]
    %v30 = vld [vmem:[%s1] sm:$0xff]
    %v31 = vld [vmem:[%s1 + $0x8] sm:$0xff]
    %v32 = vld [vmem:[%s2] sm:$0xff]
    %v33 = vld [vmem:[%s2 + $0x8] sm:$0xff]
    %35 = vset.pattern.permute.xlu0 0
    %36 = vperm.xlu0 %35, %v32
    %v37 = vpop.permute.xlu0 %36
    %40 = vset.pattern.permute.xlu0 0
    %41 = vperm.xlu0 %40, %v33
    %v42 = vpop.permute.xlu0 %41
    %vm44 = vcmask 64512
    %v46 = vsel %vm44, %v30, 0
    %v49 = vsel %vm44, %v31, 0
    %51 = vmatpush.msra.mxu0 0.0
    %52 = vmatpush.msra.mxu0 0.0
    %53 = vmatpush.msra.mxu0 0.0
    %54 = vmatpush.msra.mxu0 0.0
    %55 = vmatpush.msra.mxu0 0.0
    %56 = vmatpush.msra.mxu0 0.0
    %57 = vmatpush.msra.mxu0 0.0
    %58 = vmatpush.msra.mxu0 0.0
    %59 = vmatpush.msra.mxu0 0.0
    %60 = vmatpush.msra.mxu0 0.0
    %61 = vmatpush.msra.mxu0 0.0
    %62 = vmatpush.msra.mxu0 0.0
    %63 = vmatpush.msra.mxu0 0.0
    %64 = vmatpush.msra.mxu0 0.0
    %65 = vmatpush.msra.mxu0 0.0
    %66 = vmatpush.msra.mxu0 %v29
    %67 = vmatmul.f32.gmra.mxu0 %v46
    %v68 = vpop.f32.mrf.mxu0
    %v69 = vadd.f32 %v37, %v68
    %70 = vmatmul.f32.gmra.mxu0 %v49
    %v71 = vpop.f32.mrf.mxu0
    %v72 = vadd.f32 %v42, %v71
    %73 = vdwg.mxu0
    %v74 = vmax.f32 %v69, 0.0
    %v75 = vmax.f32 %v72, 0.0
    %v76 = vld [vmem:[%s3] sm:$0xff]
    %v77 = vld [vmem:[%s3 + $0x8] sm:$0xff]
    %v78 = vld [vmem:[%s4] sm:$0xff]
    %v79 = vld [vmem:[%s4 + $0x8] sm:$0xff]
    %81 = vset.pattern.permute.xlu0 0
    %82 = vperm.xlu0 %81, %v78
    %v83 = vpop.permute.xlu0 %82
    %86 = vset.pattern.permute.xlu0 0
    %87 = vperm.xlu0 %86, %v79
    %v88 = vpop.permute.xlu0 %87
    %vm90 = vcmask 130048
    %v92 = vsel %vm90, %v76, 0
    %v95 = vsel %vm90, %v77, 0
    %97 = vmatpush.msra.mxu0 0.0
    %98 = vmatpush.msra.mxu0 0.0
    %99 = vmatpush.msra.mxu0 0.0
    %100 = vmatpush.msra.mxu0 0.0
    %101 = vmatpush.msra.mxu0 0.0
    %102 = vmatpush.msra.mxu0 0.0
    %103 = vmatpush.msra.mxu0 0.0
    %104 = vmatpush.msra.mxu0 0.0
    %105 = vmatpush.msra.mxu0 0.0
    %106 = vmatpush.msra.mxu0 0.0
    %107 = vmatpush.msra.mxu0 0.0
    %108 = vmatpush.msra.mxu0 0.0
    %109 = vmatpush.msra.mxu0 0.0
    %110 = vmatpush.msra.mxu0 0.0
    %111 = vmatpush.msra.mxu0 %v75
    %112 = vmatpush.msra.mxu0 %v74
    %113 = vmatmul.f32.gmra.mxu0 %v92
    %v114 = vpop.f32.mrf.mxu0
    %v115 = vadd.f32 %v83, %v114
    %116 = vmatmul.f32.gmra.mxu0 %v95
    %v117 = vpop.f32.mrf.mxu0
    %v118 = vadd.f32 %v88, %v117
    %119 = vdwg.mxu0
    %v120 = vmax.f32 %v115, 0.0
    %v121 = vmax.f32 %v118, 0.0
    %v122 = vld [vmem:[%s5] sm:$0x1]
    %v123 = vld [vmem:[#allocation2] sm:$0x1]
    %125 = vset.pattern.permute.xlu0 0
    %126 = vperm.xlu0 %125, %v123
    %v127 = vpop.permute.xlu0 %126
    %v129 = vperm.slane %v127, 0
    %v131 = vsel %vm90, %v122, 0
    %133 = vmatpush.msra.mxu0 0.0
    %134 = vmatpush.msra.mxu0 0.0
    %135 = vmatpush.msra.mxu0 0.0
    %136 = vmatpush.msra.mxu0 0.0
    %137 = vmatpush.msra.mxu0 0.0
    %138 = vmatpush.msra.mxu0 0.0
    %139 = vmatpush.msra.mxu0 0.0
    %140 = vmatpush.msra.mxu0 0.0
    %141 = vmatpush.msra.mxu0 0.0
    %142 = vmatpush.msra.mxu0 0.0
    %143 = vmatpush.msra.mxu0 0.0
    %144 = vmatpush.msra.mxu0 0.0
    %145 = vmatpush.msra.mxu0 0.0
    %146 = vmatpush.msra.mxu0 0.0
    %147 = vmatpush.msra.mxu0 %v121
    %148 = vmatpush.msra.mxu0 %v120
    %149 = vmatmul.f32.gmra.mxu0 %v131
    %v150 = vpop.f32.mrf.mxu0
    %v151 = vadd.f32 %v129, %v150
    %152 = vdwg.mxu0
    %153 = vst [vmem:[#allocation3] sm:$0x1] %v151
    // Predicated region
    $region30: #{tpu_custom_call.1} parent=1 // pred_check
      _
    $region31: #{tpu_custom_call.1} parent=1 // pred_check_branch
      %155 = sbr.rel (0) target = $region33
    $region32: #{tpu_custom_call.1} parent=1 // pred_region
      %157 = vsyncadd [#allocation4], 0
      %s159 = sshll.u32 [#allocation3], 4
      %s160 = int_to_ptr.vmem [resolvable:$true] %s159
      %s161 = sshll.u32 %s7, 4
      %s162 = int_to_ptr.hbm [resolvable:$true] %s161
      %164 = dma.vmem_to_hbm [thread:$0]  %s160, 16, %s162, [#allocation4]
    $region33: #{tpu_custom_call.1} parent=1 // pred_fallthru
      _
    // Predicated region
    $region34: #{tpu_custom_call.1} parent=1 // pred_check
      _
    $region35: #{tpu_custom_call.1} parent=1 // pred_check_branch
      %166 = sbr.rel (0) target = $region37
    $region36: #{tpu_custom_call.1} parent=1 // pred_region
      %168 = dma.done [#allocation4], 16
    $region37: #{tpu_custom_call.1} parent=1 // pred_fallthru
      _
    %169 = vsyncpa [#allocation4], 1

</llo_original>
